<compile_context>
chip_gen: v7x
topology: tpu7x:2x2x1
jax: 0.10.0
libtpu: 0.0.40
codegen_flags: <defaults>
</compile_context>

<pallas_src>
import functools

import jax
import jax.numpy as jnp
from jax.experimental import pallas as pl
from jax.experimental.pallas import tpu as pltpu


_LANES = 1024           # lane-dense last dim: big multiple of 128, even for the half split
_ROWS_PER_TILE = 512    # 512 x 1024 f32 = 2 MiB per block (~86% of HBM roofline)
_MIN_GRID_STEPS = 8     # enough steps for megacore sharding + DMA/compute overlap


def _noise_kernel_tpu(seed_ref, x_ref, o_ref, *, sigma):
    """out = x + sigma * N(0,1); noise generated on-chip (HW PRNG + Box-Muller)."""
    # Decorrelate per-tile streams: multiplicative hash of (seed, tile index)
    # instead of adjacent raw seeds.
    i = pl.program_id(0)
    pltpu.prng_seed(seed_ref[0] + i * jnp.int32(668_265_263))

    rows, lanes = x_ref.shape
    half = lanes // 2

    bits1 = pltpu.bitcast(pltpu.prng_random_bits((rows, half)), jnp.uint32)
    bits2 = pltpu.bitcast(pltpu.prng_random_bits((rows, half)), jnp.uint32)

    # Mantissa trick: top 23 random bits -> floats f in [1, 2); no int->float convert.
    one_bits = jnp.uint32(0x3F800000)
    f1 = pltpu.bitcast((bits1 >> 9) | one_bits, jnp.float32)   # [1, 2)
    f2 = pltpu.bitcast((bits2 >> 9) | one_bits, jnp.float32)   # [1, 2)

    # Box-Muller, both branches.  u1 = 2 - f1 lies in (0, 1] so log is finite,
    # and sigma is fused into the radius (one fewer multiply per half-tile).
    r_s = jnp.float32(sigma) * jnp.sqrt(-2.0 * jnp.log(2.0 - f1))

    # theta = 2*pi*(f2 - 1); by periodicity sin(2*pi*f2) is identical, so skip
    # the subtract.  Only ONE trig polynomial: |cos| = sqrt(1 - sin^2) (EUP),
    # sign recovered from the quadrant f2 falls in (cos >= 0 <=> |u2-0.5| >= 0.25).
    s = jnp.sin(jnp.float32(2.0 * jnp.pi) * f2)
    cos_sign = jnp.where(jnp.abs(f2 - 1.5) > 0.25,
                         jnp.float32(1.0), jnp.float32(-1.0))
    c = cos_sign * jnp.sqrt(jnp.maximum(1.0 - s * s, 0.0))

    # Two lane-aligned half-tile loads/stores (half = 512, multiple of 128);
    # no full-tile load + slice (avoids a materialized VMEM temp).
    o_ref[:, :half] = (x_ref[:, :half].astype(jnp.float32) + r_s * c).astype(o_ref.dtype)
    o_ref[:, half:] = (x_ref[:, half:].astype(jnp.float32) + r_s * s).astype(o_ref.dtype)


def _add_noise_kernel(x_ref, n_ref, o_ref, *, sigma):
    """Portable fallback: fused x + sigma * n (n generated with jax.random)."""
    o_ref[...] = (x_ref[...].astype(jnp.float32)
                  + jnp.float32(sigma) * n_ref[...]).astype(o_ref.dtype)


def _choose_tile_rows(rows):
    """Pick a block height: <= 2 MiB blocks, >= _MIN_GRID_STEPS grid steps."""
    if rows <= 16:
        return rows                                   # single block == full array dim
    tile = min(_ROWS_PER_TILE, -(-rows // _MIN_GRID_STEPS))
    tile = max(16, (tile // 16) * 16)                 # sublane-aligned (f32 and bf16)
    return min(tile, rows)


def noise_forward(x, *, noise=True, sigma=0.1, seed=0):
    """Equivalent of Noise(noise, sigma).forward(x) for float x of any shape."""
    if not noise:
        return x

    orig_shape = x.shape
    total = x.size
    rows = max(-(-total // _LANES), 1)
    padded_total = rows * _LANES
    aligned = (padded_total == total)

    flat = x.reshape(-1)
    if not aligned:
        # Only hit when x.size is not a multiple of 1024: pad by < 1024 elements.
        flat = jnp.pad(flat, (0, padded_total - total))
    x2 = flat.reshape(rows, _LANES)

    tile_rows = _choose_tile_rows(rows)
    grid = (pl.cdiv(rows, tile_rows),)   # ragged last block handled by Pallas (masked)

    if jax.default_backend() == "tpu":
        seed_arr = jnp.array([seed], dtype=jnp.int32)
        out2 = pl.pallas_call(
            functools.partial(_noise_kernel_tpu, sigma=sigma),
            out_shape=jax.ShapeDtypeStruct(x2.shape, x2.dtype),
            grid_spec=pltpu.PrefetchScalarGridSpec(
                num_scalar_prefetch=1,
                grid=grid,
                in_specs=[pl.BlockSpec((tile_rows, _LANES),
                                       lambda i, seed_ref: (i, 0))],
                out_specs=pl.BlockSpec((tile_rows, _LANES),
                                       lambda i, seed_ref: (i, 0)),
            ),
            # x2 aliases the output (input index 1: the scalar-prefetch seed is
            # input 0): in-place add, no second HBM allocation.
            input_output_aliases={1: 0},
            compiler_params=pltpu.CompilerParams(
                dimension_semantics=("parallel",),
                vmem_limit_bytes=32 * 1024 * 1024,
            ),
        )(seed_arr, x2)
    else:
        # TODO(synk): pltpu.prng_seed/prng_random_bits have no lowering off-TPU;
        # generate the Gaussian with jax.random and keep only the fused add.
        n2 = jax.random.normal(jax.random.PRNGKey(seed), x2.shape, jnp.float32)
        out2 = pl.pallas_call(
            functools.partial(_add_noise_kernel, sigma=sigma),
            out_shape=jax.ShapeDtypeStruct(x2.shape, x2.dtype),
            grid=grid,
            in_specs=[pl.BlockSpec((tile_rows, _LANES), lambda i: (i, 0)),
                      pl.BlockSpec((tile_rows, _LANES), lambda i: (i, 0))],
            out_specs=pl.BlockSpec((tile_rows, _LANES), lambda i: (i, 0)),
        )(x2, n2)

    if aligned:
        return out2.reshape(orig_shape)        # fast path: no trailing slice
    return out2.reshape(-1)[:total].reshape(orig_shape)


if __name__ == "__main__":
    key = jax.random.PRNGKey(0)
    x = jax.random.normal(key, (2, 4, 16, 16), dtype=jnp.float32)

    sigma = 0.1

    # noise=True path (Pallas kernel)
    y = noise_forward(x, noise=True, sigma=sigma, seed=1234)
    y = jax.block_until_ready(y)

    assert y.shape == x.shape and y.dtype == x.dtype

    # sanity: residual noise has ~zero mean and ~sigma std
    resid = y - x
    m = float(jnp.mean(resid))
    s = float(jnp.std(resid))
    assert abs(m) < 5 * sigma / (x.size ** 0.5) + 0.05, f"mean off: {m}"
    assert 0.5 * sigma < s < 1.5 * sigma, f"std off: {s}"
    assert bool(jnp.all(jnp.isfinite(y)))

    # unaligned-size path (padding + ragged grid) sanity check
    x_odd = jax.random.normal(jax.random.PRNGKey(1), (3, 5, 7, 11), dtype=jnp.float32)
    y_odd = jax.block_until_ready(noise_forward(x_odd, noise=True, sigma=sigma, seed=7))
    assert y_odd.shape == x_odd.shape
    s_odd = float(jnp.std(y_odd - x_odd))
    assert 0.5 * sigma < s_odd < 1.5 * sigma, f"std off (odd): {s_odd}"

    # noise=False path: identity
    y_id = jax.block_until_ready(noise_forward(x, noise=False, sigma=sigma))
    assert bool(jnp.all(y_id == x))

    print("KERNEL_OK")
</pallas_src>

<mosaic_0001>
module attributes {stable_mosaic.version = 11 : i64} {
  func.func @_add_noise_kernel(%arg0: i32, %arg1: memref<2x1024xf32, #tpu.memory_space<vmem>>, %arg2: memref<2x1024xf32, #tpu.memory_space<vmem>>, %arg3: memref<2x1024xf32, #tpu.memory_space<vmem>>) attributes {dimension_semantics = [#tpu.dimension_semantics<arbitrary>], iteration_bounds = array<i64: 1>, scalar_prefetch = 0 : i64, scratch_operands = 0 : i64, tpu.core_type = #tpu.core_type<tc>, window_params = [{transform_indices = @transform_0, window_bounds = array<i64: 2, 1024>}, {transform_indices = @transform_1, window_bounds = array<i64: 2, 1024>}, {transform_indices = @transform_2, window_bounds = array<i64: 2, 1024>}]} {
    %c0 = arith.constant 0 : index
    %c0_0 = arith.constant 0 : index
    %0 = vector.load %arg1[%c0, %c0_0] : memref<2x1024xf32, #tpu.memory_space<vmem>>, vector<2x1024xf32>
    %c0_1 = arith.constant 0 : index
    %c0_2 = arith.constant 0 : index
    %1 = vector.load %arg2[%c0_1, %c0_2] : memref<2x1024xf32, #tpu.memory_space<vmem>>, vector<2x1024xf32>
    %cst = arith.constant 1.000000e-01 : f32
    %2 = vector.broadcast %cst : f32 to vector<2x1024xf32>
    %3 = arith.mulf %2, %1 : vector<2x1024xf32>
    %4 = arith.addf %0, %3 : vector<2x1024xf32>
    %c0_3 = arith.constant 0 : index
    %c0_4 = arith.constant 0 : index
    %5 = vector.load %arg3[%c0_3, %c0_4] : memref<2x1024xf32, #tpu.memory_space<vmem>>, vector<2x1024xf32>
    tpu.vector_store %arg3[%c0_3, %c0_4], %4 {strides = array<i32>} : memref<2x1024xf32, #tpu.memory_space<vmem>>, vector<2x1024xf32>,
    return
  }
  func.func @transform_0(%arg0: i32) -> (i32, i32) {
    %c0_i32 = arith.constant 0 : i32
    %c0_i32_0 = arith.constant 0 : i32
    return %arg0, %c0_i32 : i32, i32
  }
  func.func @transform_1(%arg0: i32) -> (i32, i32) {
    %c0_i32 = arith.constant 0 : i32
    %c0_i32_0 = arith.constant 0 : i32
    return %arg0, %c0_i32 : i32, i32
  }
  func.func @transform_2(%arg0: i32) -> (i32, i32) {
    %c0_i32 = arith.constant 0 : i32
    %c0_i32_0 = arith.constant 0 : i32
    return %arg0, %c0_i32 : i32, i32
  }
}

</mosaic_0001>

<llo_original>
// kernel: tpu_custom_call.1
$region0: #{tpu_custom_call.1}
  #allocation0 [shape = 'u32[]', space=smem, size = 0x4, offset = 0x4, fixed_abs, tag = 'smem constant byte address 0x4 - core index']
  #allocation1 [shape = 'u32[144,128]{1,0:T(1,128)}', space=vmem, size = 0x12000, scoped, tag = 'internal scratch']
  %s0 = inlined_call_operand.hbm [shape: f32[2,1024], index: 0, kind: input, shape index: {}]
  %s1 = inlined_call_operand.hbm [shape: f32[2,1024], index: 1, kind: input, shape index: {}]
  %s2 = inlined_call_operand.hbm [shape: f32[2,1024], index: 2, kind: output, shape index: {}]
  %s3 = sld [smem:[#allocation0]]
  $region26: #{tpu_custom_call.1} parent=0
    _
  %s5 = ssub.s32 1, %s3
  %s6 = scalar_select 0, %s5, %s3
  $region1: #{tpu_custom_call.1} parent=0
    #allocation2 [shape = 'u8[8192]{0}', space=vmem, size = 0x2000, scoped, tag = 'input window, operand 0, single buffered']
    #allocation3 [shape = 's32[1]{0}', space=sflag, size = 0x4, scoped, tag = 'scoped memory for tpu_custom_call.1']
    #allocation4 [shape = 's32[1]{0}', space=sflag, size = 0x4, scoped, tag = 'scoped memory for tpu_custom_call.1']
    #allocation5 [shape = 'u8[8192]{0}', space=vmem, size = 0x2000, scoped, tag = 'input window, operand 1, single buffered']
    #allocation6 [shape = 's32[1]{0}', space=sflag, size = 0x4, scoped, tag = 'scoped memory for tpu_custom_call.1']
    #allocation7 [shape = 'u8[8192]{0}', space=vmem, size = 0x2000, scoped, tag = 'output window, operand 0, single buffered']
    %7 = vsyncpa [#allocation3], 0
    %8 = vsyncpa [#allocation6], 0
    %9 = vsyncpa [#allocation4], 0
    // Predicated region
    $region2: #{tpu_custom_call.1} parent=1 // pred_check
      _
    $region3: #{tpu_custom_call.1} parent=1 // pred_check_branch
      %11 = sbr.rel (0) target = $region5
    $region4: #{tpu_custom_call.1} parent=1 // pred_region
      %s13 = ssub.s32 256, 256
      %14 = vsyncadd [#allocation3], %s13
      %s16 = sshll.u32 [#allocation2], 4
      %s17 = int_to_ptr.vmem [resolvable:$true] %s16
      %19 = dma.hbm_to_vmem [thread:$0]  %s0, 256, %s17, [#allocation3]
    $region5: #{tpu_custom_call.1} parent=1 // pred_fallthru
      _
    // Predicated region
    $region6: #{tpu_custom_call.1} parent=1 // pred_check
      _
    $region7: #{tpu_custom_call.1} parent=1 // pred_check_branch
      %21 = sbr.rel (0) target = $region9
    $region8: #{tpu_custom_call.1} parent=1 // pred_region
      %s23 = ssub.s32 256, 256
      %24 = vsyncadd [#allocation6], %s23
      %s26 = sshll.u32 [#allocation5], 4
      %s27 = int_to_ptr.vmem [resolvable:$true] %s26
      %29 = dma.hbm_to_vmem [thread:$0]  %s1, 256, %s27, [#allocation6]
    $region9: #{tpu_custom_call.1} parent=1 // pred_fallthru
      _
    // Predicated region
    $region10: #{tpu_custom_call.1} parent=1 // pred_check
      _
    $region11: #{tpu_custom_call.1} parent=1 // pred_check_branch
      %31 = sbr.rel (0) target = $region13
    $region12: #{tpu_custom_call.1} parent=1 // pred_region
      %32 = dma.done [#allocation3], 256
    $region13: #{tpu_custom_call.1} parent=1 // pred_fallthru
      _
    // Predicated region
    $region14: #{tpu_custom_call.1} parent=1 // pred_check
      _
    $region15: #{tpu_custom_call.1} parent=1 // pred_check_branch
      %34 = sbr.rel (0) target = $region17
    $region16: #{tpu_custom_call.1} parent=1 // pred_region
      %35 = dma.done [#allocation6], 256
    $region17: #{tpu_custom_call.1} parent=1 // pred_fallthru
      _
    %v36 = vld [vmem:[#allocation2] sm:$0xff]
    %v37 = vld [vmem:[#allocation2 + $0x8] sm:$0xff]
    %v38 = vld [vmem:[#allocation5] sm:$0xff]
    %v39 = vld [vmem:[#allocation5 + $0x8] sm:$0xff]
    %v40 = vmul.f32 %v38, 0.1
    %v41 = vmul.f32 %v39, 0.1
    %v42 = vadd.f32 %v36, %v40
    %v43 = vadd.f32 %v37, %v41
    %44 = vst [vmem:[#allocation7] sm:$0xff] %v42
    %45 = vst [vmem:[#allocation7 + $0x8] sm:$0xff] %v43
    // Predicated region
    $region18: #{tpu_custom_call.1} parent=1 // pred_check
      _
    $region19: #{tpu_custom_call.1} parent=1 // pred_check_branch
      %47 = sbr.rel (0) target = $region21
    $region20: #{tpu_custom_call.1} parent=1 // pred_region
      %s49 = ssub.s32 256, 256
      %50 = vsyncadd [#allocation4], %s49
      %s52 = sshll.u32 [#allocation7], 4
      %s53 = int_to_ptr.vmem [resolvable:$true] %s52
      %55 = dma.vmem_to_hbm [thread:$0]  %s53, 256, %s2, [#allocation4]
    $region21: #{tpu_custom_call.1} parent=1 // pred_fallthru
      _
    // Predicated region
    $region22: #{tpu_custom_call.1} parent=1 // pred_check
      _
    $region23: #{tpu_custom_call.1} parent=1 // pred_check_branch
      %57 = sbr.rel (0) target = $region25
    $region24: #{tpu_custom_call.1} parent=1 // pred_region
      %58 = dma.done [#allocation4], 256
    $region25: #{tpu_custom_call.1} parent=1 // pred_fallthru
      _
    %59 = vsyncpa [#allocation3], 1
    %60 = vsyncpa [#allocation6], 1
    %61 = vsyncpa [#allocation4], 1

</llo_original>
